<compile_context>
chip_gen: v7x
topology: tpu7x:2x2x1
jax: 0.10.0
libtpu: 0.0.40
codegen_flags: <defaults>
</compile_context>

<pallas_src>
import functools

import numpy as np
import jax
import jax.numpy as jnp
from jax import lax
from jax.experimental import pallas as pl
from jax.experimental.pallas import tpu as pltpu


# ----------------------------------------------------------------------------
# Shared body: TemporalShift + Res2 hierarchical depthwise (3,1) temporal conv.
# Works on a single (C, T*F) slab: channels on the sublane axis, (T, F)
# flattened onto the 128-lane axis; the temporal 3-tap conv and the shift are
# lane rotations (pltpu.roll, XLU) gated by hoisted boundary masks.
# ----------------------------------------------------------------------------
def _make_branch_fn(w_ref, *, scale, fold, width, T, F):
    """Build (once per kernel) the TemporalShift + Res2 branch computation.

    Everything that is batch-independent (lane iotas, boundary masks, weight
    casts) is materialized exactly once here; the returned closure only does
    rolls / selects / FMAs.

    Returns run(x): x is a (C, T*F) f32 array; the result is a list of `scale`
    (width, T*F) f32 branch outputs (their channel concatenation is the
    pre-BN activation).
    """
    TF = T * F

    lane = lax.broadcasted_iota(jnp.int32, (width, TF), 1)
    mask_next = lane < (T - 1) * F          # valid lanes when reading t+1
    mask_prev = lane >= F                   # valid lanes when reading t-1
    ch_base = lax.broadcasted_iota(jnp.int32, (width, 1), 0)

    # Per-channel taps, cast once: w[i][k] has shape (width, 1) and broadcasts
    # over lanes.  Tap k = 0 / 1 / 2 multiplies x[t-1] / x[t] / x[t+1].
    w = [[w_ref[i, k].astype(jnp.float32) for k in range(3)]
         for i in range(scale - 1)]

    def shift_next(a):                      # out[:, t, f] = a[:, t+1, f]; 0 at t = T-1
        return jnp.where(mask_next, pltpu.roll(a, TF - F, 1), 0.0)

    def shift_prev(a):                      # out[:, t, f] = a[:, t-1, f]; 0 at t = 0
        return jnp.where(mask_prev, pltpu.roll(a, F, 1), 0.0)

    def run(x):
        def shifted_group(i):
            # TemporalShift touches only channels [0, 2*fold): the first fold
            # channels shift "next", the second fold shift "prev".  Row-masked
            # select (no sublane concatenate), so groups may straddle 2*fold.
            lo = i * width
            g = x[lo:lo + width]
            if fold == 0 or lo >= 2 * fold:
                return g
            ch = ch_base + lo
            shifted = jnp.where(ch < fold, shift_next(g), shift_prev(g))
            return jnp.where(ch < 2 * fold, shifted, g)

        outs = [shifted_group(0)]
        y = outs[0]
        for i in range(1, scale):
            sp = shifted_group(i) + y
            w0, w1, w2 = w[i - 1]
            sp = w0 * shift_prev(sp) + w1 * sp + w2 * shift_next(sp)
            y = sp
            outs.append(sp)
        return outs

    return run


# ----------------------------------------------------------------------------
# Fused single-call kernel: branches + BN batch stats + BN affine + ReLU.
# The f32 intermediate stays resident in the `y_scr` VMEM scratch; HBM traffic
# is the x read and the final output write only.
# ----------------------------------------------------------------------------
def _res2tsm_fused_kernel(x_ref, w_ref, gamma_ref, beta_ref, o_ref, y_scr,
                          *, scale, fold, width, T, F, eps):
    B = x_ref.shape[0]
    C = scale * width
    TF = T * F
    n = float(B * TF)

    branch_fn = _make_branch_fn(w_ref, scale=scale, fold=fold, width=width,
                                T=T, F=F)

    # Pass 1: per-batch branch outputs -> VMEM scratch + per-channel sums.
    ch_sum = jnp.zeros((C, 1), jnp.float32)
    for b in range(B):                               # B is small on this path
        outs = branch_fn(x_ref[b].astype(jnp.float32))
        sums = []
        for i, o in enumerate(outs):
            y_scr[b, i * width:(i + 1) * width, :] = o
            sums.append(jnp.sum(o, axis=1, keepdims=True))
        ch_sum = ch_sum + jnp.concatenate(sums, axis=0)
    mean = ch_sum * (1.0 / n)                        # (C, 1)

    # Pass 2 (VMEM-resident): exact two-pass (centered) biased variance.
    ch_sq = jnp.zeros((C, 1), jnp.float32)
    for b in range(B):
        d = y_scr[b, :, :] - mean
        ch_sq = ch_sq + jnp.sum(d * d, axis=1, keepdims=True)
    var = ch_sq * (1.0 / n)

    inv = gamma_ref[...] * lax.rsqrt(var + eps)      # (C, 1)
    bias = beta_ref[...] - mean * inv

    # Pass 3: BN affine + ReLU; one full-width, lane-dense store per batch row.
    for b in range(B):
        o_ref[b, :, :] = jnp.maximum(
            y_scr[b, :, :] * inv + bias, 0.0).astype(o_ref.dtype)


# ----------------------------------------------------------------------------
# Two-pass fallback (problems that do not fit on-chip), pass 1:
# branches + per-block BN partial sums.  Branch outputs are accumulated in an
# f32 VMEM scratch and written back with a single full-block cast+store; the
# per-channel sum / sum-sq partials are stored directly into output slices.
# ----------------------------------------------------------------------------
def _res2tsm_branches_kernel(x_ref, w_ref, y_ref, sum_ref, ssq_ref, y_scr,
                             *, scale, fold, width, T, F):
    branch_fn = _make_branch_fn(w_ref, scale=scale, fold=fold, width=width,
                                T=T, F=F)
    outs = branch_fn(x_ref[0].astype(jnp.float32))
    for i, o in enumerate(outs):
        lo, hi = i * width, (i + 1) * width
        y_scr[lo:hi, :] = o
        sum_ref[0, lo:hi, :] = jnp.sum(o, axis=1, keepdims=True)
        ssq_ref[0, lo:hi, :] = jnp.sum(o * o, axis=1, keepdims=True)
    # Single full-block cast + store of the intermediate.
    y_ref[0] = y_scr[...].astype(y_ref.dtype)


# ----------------------------------------------------------------------------
# Two-pass fallback, pass 2: fused BN affine (precomputed scale/bias) + ReLU.
# ----------------------------------------------------------------------------
def _bn_relu_kernel(y_ref, scale_ref, bias_ref, o_ref):
    o_ref[0] = jnp.maximum(
        y_ref[0].astype(jnp.float32) * scale_ref[...] + bias_ref[...],
        0.0).astype(o_ref.dtype)


def _vmem_capacity_bytes(default=64 * 1024 * 1024):
    """Physical VMEM per TensorCore; conservative v7x default if query fails."""
    try:
        return int(pltpu.get_tpu_info().vmem_capacity_bytes)
    except Exception:
        return default


# ----------------------------------------------------------------------------
# Wrapper: NCHW in / NCHW out, matches Res2TSMBlock.forward semantics.
# conv_w layout: (scale-1, 3, width, 1); conv_w[i, k, c, 0] = tap k (t-1, t,
# t+1) of branch i+1's depthwise weight for channel c (PyTorch
# convs[i].weight[c, 0, k, 0]).
# ----------------------------------------------------------------------------
def res2tsm_block(x_nchw, conv_w, gamma, beta, *, scale=4, shift_div=8,
                  eps=1e-5, out_dtype=jnp.float32, interm_dtype=jnp.bfloat16,
                  force_two_pass=False):
    B, C, T, F = x_nchw.shape
    assert C % scale == 0, "channels must be divisible by scale"
    width = C // scale
    fold = C // shift_div
    TF = T * F
    assert conv_w.shape == (scale - 1, 3, width, 1)

    # Layout-preserving merge of the trailing (T, F) dims onto the lane axis;
    # no XLA transpose passes over HBM.
    x2 = x_nchw.reshape(B, C, TF)
    gamma2 = gamma.reshape(C, 1).astype(jnp.float32)
    beta2 = beta.reshape(C, 1).astype(jnp.float32)

    f32 = 4
    out_b = np.dtype(out_dtype).itemsize
    vmem_cap = _vmem_capacity_bytes()

    # ------------------------- fused single-kernel path ----------------------
    # Whole problem resident on-chip: x block + output block + f32 scratch for
    # the intermediate + a few full-channel-slab f32 temporaries.
    fused_est = (B * C * TF * (2 * f32 + out_b)          # x block, y scratch, out
                 + 6 * C * TF * f32                      # in-kernel f32 temps
                 + (1 << 20))                            # headroom
    fused_budget = min(40 * 1024 * 1024, int(0.65 * vmem_cap))   # v7x-safe
    use_fused = (not force_two_pass) and fused_est <= fused_budget and B <= 16

    if use_fused:
        # TODO(synk): a 2-TensorCore (v7x) split of the fused kernel needs a
        # cross-core reduction of the BN statistics (CMEM / core barrier);
        # not implemented — the fusion already removes the dominating HBM
        # round-trip at these sizes.  The fallback path keeps a parallel grid.
        kern = functools.partial(_res2tsm_fused_kernel, scale=scale, fold=fold,
                                 width=width, T=T, F=F, eps=eps)
        out = pl.pallas_call(
            kern,
            grid=(1,),
            in_specs=[
                pl.BlockSpec((B, C, TF), lambda i: (0, 0, 0)),
                pl.BlockSpec((scale - 1, 3, width, 1), lambda i: (0, 0, 0, 0)),
                pl.BlockSpec((C, 1), lambda i: (0, 0)),
                pl.BlockSpec((C, 1), lambda i: (0, 0)),
            ],
            out_specs=pl.BlockSpec((B, C, TF), lambda i: (0, 0, 0)),
            out_shape=jax.ShapeDtypeStruct((B, C, TF), out_dtype),
            scratch_shapes=[pltpu.VMEM((B, C, TF), jnp.float32)],
            compiler_params=pltpu.CompilerParams(
                dimension_semantics=("arbitrary",),
                vmem_limit_bytes=int(min(max(fused_est + (4 << 20), 16 << 20),
                                         int(0.8 * vmem_cap)))),
        )(x2, conv_w, gamma2, beta2)
        return out.reshape(B, C, T, F)

    # --------------------- two-pass fallback (large problems) ----------------
    # Pass 1: branches + per-block BN partials with a parallel batch grid
    # (both v7x TensorCores usable); the intermediate goes to HBM as
    # `interm_dtype` (bf16 default) to halve its traffic.
    interm_b = np.dtype(interm_dtype).itemsize
    vmem_p1 = (2 * C * TF * f32                              # double-buffered x
               + 2 * (C * TF * interm_b + 2 * C * f32)       # double-buffered outs
               + C * TF * f32                                # f32 scratch
               + 5 * C * TF * f32 + (2 << 20))               # temps + headroom
    vmem_p2 = (2 * C * TF * interm_b + 2 * C * TF * out_b
               + 2 * C * TF * f32 + (2 << 20))
    vmem_fb = int(min(max(vmem_p1, vmem_p2, 16 << 20), int(0.8 * vmem_cap)))

    kern1 = functools.partial(_res2tsm_branches_kernel, scale=scale, fold=fold,
                              width=width, T=T, F=F)
    y, s, ssq = pl.pallas_call(
        kern1,
        grid=(B,),
        in_specs=[
            pl.BlockSpec((1, C, TF), lambda b: (b, 0, 0)),
            pl.BlockSpec((scale - 1, 3, width, 1), lambda b: (0, 0, 0, 0)),
        ],
        out_specs=(
            pl.BlockSpec((1, C, TF), lambda b: (b, 0, 0)),
            pl.BlockSpec((1, C, 1), lambda b: (b, 0, 0)),
            pl.BlockSpec((1, C, 1), lambda b: (b, 0, 0)),
        ),
        out_shape=(
            jax.ShapeDtypeStruct((B, C, TF), interm_dtype),
            jax.ShapeDtypeStruct((B, C, 1), jnp.float32),
            jax.ShapeDtypeStruct((B, C, 1), jnp.float32),
        ),
        scratch_shapes=[pltpu.VMEM((C, TF), jnp.float32)],
        compiler_params=pltpu.CompilerParams(
            dimension_semantics=("parallel",),
            vmem_limit_bytes=vmem_fb),
    )(x2, conv_w)

    # Training-mode BatchNorm2d batch statistics (biased variance), reduced
    # over the tiny per-block partials in plain JAX.
    # TODO(synk): nn.BatchNorm2d running_mean/running_var buffer updates are a
    # module-state side effect and are not modeled here.
    n = B * TF
    mean = jnp.sum(s[:, :, 0], axis=0) / n
    var = jnp.maximum(jnp.sum(ssq[:, :, 0], axis=0) / n - mean * mean, 0.0)
    inv = gamma * lax.rsqrt(var + eps)
    scale_c = inv.reshape(C, 1).astype(jnp.float32)
    bias_c = (beta - mean * inv).reshape(C, 1).astype(jnp.float32)

    out = pl.pallas_call(
        _bn_relu_kernel,
        grid=(B,),
        in_specs=[
            pl.BlockSpec((1, C, TF), lambda b: (b, 0, 0)),
            pl.BlockSpec((C, 1), lambda b: (0, 0)),
            pl.BlockSpec((C, 1), lambda b: (0, 0)),
        ],
        out_specs=pl.BlockSpec((1, C, TF), lambda b: (b, 0, 0)),
        out_shape=jax.ShapeDtypeStruct((B, C, TF), out_dtype),
        compiler_params=pltpu.CompilerParams(
            dimension_semantics=("parallel",),
            vmem_limit_bytes=vmem_fb),
    )(y, scale_c, bias_c)

    return out.reshape(B, C, T, F)


# ----------------------------------------------------------------------------
# Pure-JAX reference (mirrors the PyTorch module exactly), for verification.
# ----------------------------------------------------------------------------
def res2tsm_block_ref(x, conv_w, gamma, beta, *, scale=4, shift_div=8,
                      eps=1e-5):
    B, C, T, F = x.shape
    fold = C // shift_div
    width = C // scale

    t = jnp.transpose(x, (0, 2, 1, 3))                     # (B, T, C, F)
    out = jnp.zeros_like(t)
    out = out.at[:, :-1, :fold, :].set(t[:, 1:, :fold, :])
    out = out.at[:, 1:, fold:2 * fold, :].set(t[:, :-1, fold:2 * fold, :])
    out = out.at[:, :, 2 * fold:, :].set(t[:, :, 2 * fold:, :])
    xs = jnp.transpose(out, (0, 2, 1, 3))                  # (B, C, T, F)

    splits = [xs[:, i * width:(i + 1) * width] for i in range(scale)]
    y = splits[0]
    outs = [y]
    for i in range(1, scale):
        sp = splits[i] + y
        prev = jnp.pad(sp, ((0, 0), (0, 0), (1, 0), (0, 0)))[:, :, :T, :]
        nxt = jnp.pad(sp, ((0, 0), (0, 0), (0, 1), (0, 0)))[:, :, 1:, :]
        w0 = conv_w[i - 1, 0, :, 0].reshape(1, width, 1, 1)
        w1 = conv_w[i - 1, 1, :, 0].reshape(1, width, 1, 1)
        w2 = conv_w[i - 1, 2, :, 0].reshape(1, width, 1, 1)
        sp = w0 * prev + w1 * sp + w2 * nxt
        y = sp
        outs.append(sp)
    o = jnp.concatenate(outs, axis=1)

    mean = o.mean(axis=(0, 2, 3))
    var = ((o - mean[None, :, None, None]) ** 2).mean(axis=(0, 2, 3))
    on = (o - mean[None, :, None, None]) / jnp.sqrt(
        var[None, :, None, None] + eps)
    on = on * gamma[None, :, None, None] + beta[None, :, None, None]
    return jnp.maximum(on, 0.0)


if __name__ == "__main__":
    # NCHW x = (B, C, T, F); T*F = 128 -> exactly lane-dense blocks.
    B, C, T, F = 2, 32, 8, 16
    scale, shift_div = 4, 8
    width = C // scale

    key = jax.random.PRNGKey(0)
    kx, kw, kg, kb = jax.random.split(key, 4)

    x = jax.random.normal(kx, (B, C, T, F), jnp.float32)
    conv_w = 0.3 * jax.random.normal(kw, (scale - 1, 3, width, 1), jnp.float32)
    gamma = 1.0 + 0.1 * jax.random.normal(kg, (C,), jnp.float32)
    beta = 0.1 * jax.random.normal(kb, (C,), jnp.float32)

    ref = res2tsm_block_ref(x, conv_w, gamma, beta,
                            scale=scale, shift_div=shift_div)

    # Default path: fully fused single kernel, intermediate kept in VMEM.
    out = res2tsm_block(x, conv_w, gamma, beta, scale=scale,
                        shift_div=shift_div)
    out = jax.block_until_ready(out)
    np.testing.assert_allclose(np.asarray(out), np.asarray(ref),
                               rtol=1e-3, atol=1e-3)

    # Also exercise the two-pass fallback used when the problem does not fit
    # on-chip (f32 HBM intermediate here -> tight tolerance).
    out_fb = res2tsm_block(x, conv_w, gamma, beta, scale=scale,
                           shift_div=shift_div, force_two_pass=True,
                           interm_dtype=jnp.float32)
    out_fb = jax.block_until_ready(out_fb)
    np.testing.assert_allclose(np.asarray(out_fb), np.asarray(ref),
                               rtol=1e-3, atol=1e-3)

    print("KERNEL_OK")
</pallas_src>

<mosaic_0001>
module attributes {stable_mosaic.version = 11 : i64} {
  func.func @_res2tsm_fused_kernel(%arg0: i32, %arg1: memref<2x32x128xf32, #tpu.memory_space<vmem>>, %arg2: memref<3x3x8x1xf32, #tpu.memory_space<vmem>>, %arg3: memref<32x1xf32, #tpu.memory_space<vmem>>, %arg4: memref<32x1xf32, #tpu.memory_space<vmem>>, %arg5: memref<2x32x128xf32, #tpu.memory_space<vmem>>, %arg6: memref<2x32x128xf32, #tpu.memory_space<vmem>>) attributes {dimension_semantics = [#tpu.dimension_semantics<arbitrary>], iteration_bounds = array<i64: 1>, scalar_prefetch = 0 : i64, scratch_operands = 1 : i64, tpu.core_type = #tpu.core_type<tc>, window_params = [{pipeline_mode = #tpu.pipeline_mode<synchronous>, transform_indices = @transform_0, window_bounds = array<i64: 2, 32, 128>}, {pipeline_mode = #tpu.pipeline_mode<synchronous>, transform_indices = @transform_1, window_bounds = array<i64: 3, 3, 8, 1>}, {pipeline_mode = #tpu.pipeline_mode<synchronous>, transform_indices = @transform_2, window_bounds = array<i64: 32, 1>}, {pipeline_mode = #tpu.pipeline_mode<synchronous>, transform_indices = @transform_3, window_bounds = array<i64: 32, 1>}, {pipeline_mode = #tpu.pipeline_mode<synchronous>, transform_indices = @transform_4, window_bounds = array<i64: 2, 32, 128>}]} {
    %0 = tpu.iota {dimensions = array<i32: 1>} : vector<8x128xi32>
    %c112_i32 = arith.constant 112 : i32
    %1 = vector.broadcast %c112_i32 : i32 to vector<8x128xi32>
    %2 = arith.cmpi slt, %0, %1 : vector<8x128xi32>
    %c16_i32 = arith.constant 16 : i32
    %3 = vector.broadcast %c16_i32 : i32 to vector<8x128xi32>
    %4 = arith.cmpi sge, %0, %3 : vector<8x128xi32>
    %5 = tpu.iota {dimensions = array<i32: 0>} : vector<8x1xi32>
    %c0 = arith.constant 0 : index
    %c0_0 = arith.constant 0 : index
    %c0_1 = arith.constant 0 : index
    %c0_2 = arith.constant 0 : index
    %6 = vector.load %arg2[%c0, %c0_0, %c0_1, %c0_2] : memref<3x3x8x1xf32, #tpu.memory_space<vmem>>, vector<1x1x8x1xf32>
    %7 = vector.shape_cast %6 : vector<1x1x8x1xf32> to vector<8x1xf32>
    %c0_3 = arith.constant 0 : index
    %c1 = arith.constant 1 : index
    %c0_4 = arith.constant 0 : index
    %c0_5 = arith.constant 0 : index
    %8 = vector.load %arg2[%c0_3, %c1, %c0_4, %c0_5] : memref<3x3x8x1xf32, #tpu.memory_space<vmem>>, vector<1x1x8x1xf32>
    %9 = vector.shape_cast %8 : vector<1x1x8x1xf32> to vector<8x1xf32>
    %c0_6 = arith.constant 0 : index
    %c2 = arith.constant 2 : index
    %c0_7 = arith.constant 0 : index
    %c0_8 = arith.constant 0 : index
    %10 = vector.load %arg2[%c0_6, %c2, %c0_7, %c0_8] : memref<3x3x8x1xf32, #tpu.memory_space<vmem>>, vector<1x1x8x1xf32>
    %11 = vector.shape_cast %10 : vector<1x1x8x1xf32> to vector<8x1xf32>
    %c1_9 = arith.constant 1 : index
    %c0_10 = arith.constant 0 : index
    %c0_11 = arith.constant 0 : index
    %c0_12 = arith.constant 0 : index
    %12 = vector.load %arg2[%c1_9, %c0_10, %c0_11, %c0_12] : memref<3x3x8x1xf32, #tpu.memory_space<vmem>>, vector<1x1x8x1xf32>
    %13 = vector.shape_cast %12 : vector<1x1x8x1xf32> to vector<8x1xf32>
    %c1_13 = arith.constant 1 : index
    %c1_14 = arith.constant 1 : index
    %c0_15 = arith.constant 0 : index
    %c0_16 = arith.constant 0 : index
    %14 = vector.load %arg2[%c1_13, %c1_14, %c0_15, %c0_16] : memref<3x3x8x1xf32, #tpu.memory_space<vmem>>, vector<1x1x8x1xf32>
    %15 = vector.shape_cast %14 : vector<1x1x8x1xf32> to vector<8x1xf32>
    %c1_17 = arith.constant 1 : index
    %c2_18 = arith.constant 2 : index
    %c0_19 = arith.constant 0 : index
    %c0_20 = arith.constant 0 : index
    %16 = vector.load %arg2[%c1_17, %c2_18, %c0_19, %c0_20] : memref<3x3x8x1xf32, #tpu.memory_space<vmem>>, vector<1x1x8x1xf32>
    %17 = vector.shape_cast %16 : vector<1x1x8x1xf32> to vector<8x1xf32>
    %c2_21 = arith.constant 2 : index
    %c0_22 = arith.constant 0 : index
    %c0_23 = arith.constant 0 : index
    %c0_24 = arith.constant 0 : index
    %18 = vector.load %arg2[%c2_21, %c0_22, %c0_23, %c0_24] : memref<3x3x8x1xf32, #tpu.memory_space<vmem>>, vector<1x1x8x1xf32>
    %19 = vector.shape_cast %18 : vector<1x1x8x1xf32> to vector<8x1xf32>
    %c2_25 = arith.constant 2 : index
    %c1_26 = arith.constant 1 : index
    %c0_27 = arith.constant 0 : index
    %c0_28 = arith.constant 0 : index
    %20 = vector.load %arg2[%c2_25, %c1_26, %c0_27, %c0_28] : memref<3x3x8x1xf32, #tpu.memory_space<vmem>>, vector<1x1x8x1xf32>
    %21 = vector.shape_cast %20 : vector<1x1x8x1xf32> to vector<8x1xf32>
    %c2_29 = arith.constant 2 : index
    %c2_30 = arith.constant 2 : index
    %c0_31 = arith.constant 0 : index
    %c0_32 = arith.constant 0 : index
    %22 = vector.load %arg2[%c2_29, %c2_30, %c0_31, %c0_32] : memref<3x3x8x1xf32, #tpu.memory_space<vmem>>, vector<1x1x8x1xf32>
    %23 = vector.shape_cast %22 : vector<1x1x8x1xf32> to vector<8x1xf32>
    %cst = arith.constant 0.000000e+00 : f32
    %24 = vector.broadcast %cst : f32 to vector<32x1xf32>
    %c0_33 = arith.constant 0 : index
    %c0_34 = arith.constant 0 : index
    %c0_35 = arith.constant 0 : index
    %25 = vector.load %arg1[%c0_33, %c0_34, %c0_35] : memref<2x32x128xf32, #tpu.memory_space<vmem>>, vector<1x32x128xf32>
    %26 = vector.shape_cast %25 : vector<1x32x128xf32> to vector<32x128xf32>
    %27 = vector.extract_strided_slice %26 {offsets = [0, 0], sizes = [8, 128], strides = [1, 1]} : vector<32x128xf32> to vector<8x128xf32>
    %c0_i32 = arith.constant 0 : i32
    %28 = vector.broadcast %c0_i32 : i32 to vector<8x1xi32>
    %29 = arith.addi %5, %28 : vector<8x1xi32>
    %c4_i32 = arith.constant 4 : i32
    %30 = vector.broadcast %c4_i32 : i32 to vector<8x1xi32>
    %31 = arith.cmpi slt, %29, %30 : vector<8x1xi32>
    %c112_i32_36 = arith.constant 112 : i32
    %32 = tpu.dynamic_rotate %27 by %c112_i32_36 dim 1 : vector<8x128xf32>, i32 -> vector<8x128xf32>
    %cst_37 = arith.constant 0.000000e+00 : f32
    %33 = vector.broadcast %cst_37 : f32 to vector<8x128xf32>
    %34 = arith.select %2, %32, %33 : vector<8x128xi1>, vector<8x128xf32>
    %c16_i32_38 = arith.constant 16 : i32
    %35 = tpu.dynamic_rotate %27 by %c16_i32_38 dim 1 : vector<8x128xf32>, i32 -> vector<8x128xf32>
    %cst_39 = arith.constant 0.000000e+00 : f32
    %36 = vector.broadcast %cst_39 : f32 to vector<8x128xf32>
    %37 = arith.select %4, %35, %36 : vector<8x128xi1>, vector<8x128xf32>
    %38 = vector.shape_cast %31 : vector<8x1xi1> to vector<8x1xi1>
    %39 = vector.broadcast %38 : vector<8x1xi1> to vector<8x128xi1>
    %40 = arith.select %39, %34, %37 : vector<8x128xi1>, vector<8x128xf32>
    %c8_i32 = arith.constant 8 : i32
    %41 = vector.broadcast %c8_i32 : i32 to vector<8x1xi32>
    %42 = arith.cmpi slt, %29, %41 : vector<8x1xi32>
    %43 = vector.shape_cast %42 : vector<8x1xi1> to vector<8x1xi1>
    %44 = vector.broadcast %43 : vector<8x1xi1> to vector<8x128xi1>
    %45 = arith.select %44, %40, %27 : vector<8x128xi1>, vector<8x128xf32>
    %46 = vector.extract_strided_slice %26 {offsets = [8, 0], sizes = [8, 128], strides = [1, 1]} : vector<32x128xf32> to vector<8x128xf32>
    %47 = arith.addf %46, %45 : vector<8x128xf32>
    %c16_i32_40 = arith.constant 16 : i32
    %48 = tpu.dynamic_rotate %47 by %c16_i32_40 dim 1 : vector<8x128xf32>, i32 -> vector<8x128xf32>
    %cst_41 = arith.constant 0.000000e+00 : f32
    %49 = vector.broadcast %cst_41 : f32 to vector<8x128xf32>
    %50 = arith.select %4, %48, %49 : vector<8x128xi1>, vector<8x128xf32>
    %51 = vector.broadcast %7 : vector<8x1xf32> to vector<8x128xf32>
    %52 = arith.mulf %51, %50 : vector<8x128xf32>
    %53 = vector.broadcast %9 : vector<8x1xf32> to vector<8x128xf32>
    %54 = arith.mulf %53, %47 : vector<8x128xf32>
    %55 = arith.addf %52, %54 : vector<8x128xf32>
    %c112_i32_42 = arith.constant 112 : i32
    %56 = tpu.dynamic_rotate %47 by %c112_i32_42 dim 1 : vector<8x128xf32>, i32 -> vector<8x128xf32>
    %cst_43 = arith.constant 0.000000e+00 : f32
    %57 = vector.broadcast %cst_43 : f32 to vector<8x128xf32>
    %58 = arith.select %2, %56, %57 : vector<8x128xi1>, vector<8x128xf32>
    %59 = vector.broadcast %11 : vector<8x1xf32> to vector<8x128xf32>
    %60 = arith.mulf %59, %58 : vector<8x128xf32>
    %61 = arith.addf %55, %60 : vector<8x128xf32>
    %62 = vector.extract_strided_slice %26 {offsets = [16, 0], sizes = [8, 128], strides = [1, 1]} : vector<32x128xf32> to vector<8x128xf32>
    %63 = arith.addf %62, %61 : vector<8x128xf32>
    %c16_i32_44 = arith.constant 16 : i32
    %64 = tpu.dynamic_rotate %63 by %c16_i32_44 dim 1 : vector<8x128xf32>, i32 -> vector<8x128xf32>
    %cst_45 = arith.constant 0.000000e+00 : f32
    %65 = vector.broadcast %cst_45 : f32 to vector<8x128xf32>
    %66 = arith.select %4, %64, %65 : vector<8x128xi1>, vector<8x128xf32>
    %67 = vector.broadcast %13 : vector<8x1xf32> to vector<8x128xf32>
    %68 = arith.mulf %67, %66 : vector<8x128xf32>
    %69 = vector.broadcast %15 : vector<8x1xf32> to vector<8x128xf32>
    %70 = arith.mulf %69, %63 : vector<8x128xf32>
    %71 = arith.addf %68, %70 : vector<8x128xf32>
    %c112_i32_46 = arith.constant 112 : i32
    %72 = tpu.dynamic_rotate %63 by %c112_i32_46 dim 1 : vector<8x128xf32>, i32 -> vector<8x128xf32>
    %cst_47 = arith.constant 0.000000e+00 : f32
    %73 = vector.broadcast %cst_47 : f32 to vector<8x128xf32>
    %74 = arith.select %2, %72, %73 : vector<8x128xi1>, vector<8x128xf32>
    %75 = vector.broadcast %17 : vector<8x1xf32> to vector<8x128xf32>
    %76 = arith.mulf %75, %74 : vector<8x128xf32>
    %77 = arith.addf %71, %76 : vector<8x128xf32>
    %78 = vector.extract_strided_slice %26 {offsets = [24, 0], sizes = [8, 128], strides = [1, 1]} : vector<32x128xf32> to vector<8x128xf32>
    %79 = arith.addf %78, %77 : vector<8x128xf32>
    %c16_i32_48 = arith.constant 16 : i32
    %80 = tpu.dynamic_rotate %79 by %c16_i32_48 dim 1 : vector<8x128xf32>, i32 -> vector<8x128xf32>
    %cst_49 = arith.constant 0.000000e+00 : f32
    %81 = vector.broadcast %cst_49 : f32 to vector<8x128xf32>
    %82 = arith.select %4, %80, %81 : vector<8x128xi1>, vector<8x128xf32>
    %83 = vector.broadcast %19 : vector<8x1xf32> to vector<8x128xf32>
    %84 = arith.mulf %83, %82 : vector<8x128xf32>
    %85 = vector.broadcast %21 : vector<8x1xf32> to vector<8x128xf32>
    %86 = arith.mulf %85, %79 : vector<8x128xf32>
    %87 = arith.addf %84, %86 : vector<8x128xf32>
    %c112_i32_50 = arith.constant 112 : i32
    %88 = tpu.dynamic_rotate %79 by %c112_i32_50 dim 1 : vector<8x128xf32>, i32 -> vector<8x128xf32>
    %cst_51 = arith.constant 0.000000e+00 : f32
    %89 = vector.broadcast %cst_51 : f32 to vector<8x128xf32>
    %90 = arith.select %2, %88, %89 : vector<8x128xi1>, vector<8x128xf32>
    %91 = vector.broadcast %23 : vector<8x1xf32> to vector<8x128xf32>
    %92 = arith.mulf %91, %90 : vector<8x128xf32>
    %93 = arith.addf %87, %92 : vector<8x128xf32>
    %c0_52 = arith.constant 0 : index
    %c0_53 = arith.constant 0 : index
    %c0_54 = arith.constant 0 : index
    %94 = vector.load %arg6[%c0_52, %c0_53, %c0_54] : memref<2x32x128xf32, #tpu.memory_space<vmem>>, vector<1x8x128xf32>
    %95 = vector.shape_cast %94 : vector<1x8x128xf32> to vector<8x128xf32>
    %96 = vector.shape_cast %45 : vector<8x128xf32> to vector<1x8x128xf32>
    tpu.vector_store %arg6[%c0_52, %c0_53, %c0_54], %96 {strides = array<i32>} : memref<2x32x128xf32, #tpu.memory_space<vmem>>, vector<1x8x128xf32>,
    %cst_55 = arith.constant dense<0.000000e+00> : vector<8xf32>
    %97 = vector.multi_reduction <add>, %45, %cst_55 [1] : vector<8x128xf32> to vector<8xf32>
    %98 = vector.shape_cast %97 : vector<8xf32> to vector<8x1xf32>
    %c0_56 = arith.constant 0 : index
    %c8 = arith.constant 8 : index
    %c0_57 = arith.constant 0 : index
    %99 = vector.load %arg6[%c0_56, %c8, %c0_57] : memref<2x32x128xf32, #tpu.memory_space<vmem>>, vector<1x8x128xf32>
    %100 = vector.shape_cast %99 : vector<1x8x128xf32> to vector<8x128xf32>
    %101 = vector.shape_cast %61 : vector<8x128xf32> to vector<1x8x128xf32>
    tpu.vector_store %arg6[%c0_56, %c8, %c0_57], %101 {strides = array<i32>} : memref<2x32x128xf32, #tpu.memory_space<vmem>>, vector<1x8x128xf32>,
    %cst_58 = arith.constant dense<0.000000e+00> : vector<8xf32>
    %102 = vector.multi_reduction <add>, %61, %cst_58 [1] : vector<8x128xf32> to vector<8xf32>
    %103 = vector.shape_cast %102 : vector<8xf32> to vector<8x1xf32>
    %c0_59 = arith.constant 0 : index
    %c16 = arith.constant 16 : index
    %c0_60 = arith.constant 0 : index
    %104 = vector.load %arg6[%c0_59, %c16, %c0_60] : memref<2x32x128xf32, #tpu.memory_space<vmem>>, vector<1x8x128xf32>
    %105 = vector.shape_cast %104 : vector<1x8x128xf32> to vector<8x128xf32>
    %106 = vector.shape_cast %77 : vector<8x128xf32> to vector<1x8x128xf32>
    tpu.vector_store %arg6[%c0_59, %c16, %c0_60], %106 {strides = array<i32>} : memref<2x32x128xf32, #tpu.memory_space<vmem>>, vector<1x8x128xf32>,
    %cst_61 = arith.constant dense<0.000000e+00> : vector<8xf32>
    %107 = vector.multi_reduction <add>, %77, %cst_61 [1] : vector<8x128xf32> to vector<8xf32>
    %108 = vector.shape_cast %107 : vector<8xf32> to vector<8x1xf32>
    %c0_62 = arith.constant 0 : index
    %c24 = arith.constant 24 : index
    %c0_63 = arith.constant 0 : index
    %109 = vector.load %arg6[%c0_62, %c24, %c0_63] : memref<2x32x128xf32, #tpu.memory_space<vmem>>, vector<1x8x128xf32>
    %110 = vector.shape_cast %109 : vector<1x8x128xf32> to vector<8x128xf32>
    %111 = vector.shape_cast %93 : vector<8x128xf32> to vector<1x8x128xf32>
    tpu.vector_store %arg6[%c0_62, %c24, %c0_63], %111 {strides = array<i32>} : memref<2x32x128xf32, #tpu.memory_space<vmem>>, vector<1x8x128xf32>,
    %cst_64 = arith.constant dense<0.000000e+00> : vector<8xf32>
    %112 = vector.multi_reduction <add>, %93, %cst_64 [1] : vector<8x128xf32> to vector<8xf32>
    %113 = vector.shape_cast %112 : vector<8xf32> to vector<8x1xf32>
    %114 = tpu.concatenate %98, %103, %108, %113 in 0 : vector<8x1xf32>, vector<8x1xf32>, vector<8x1xf32>, vector<8x1xf32> -> vector<32x1xf32>
    %115 = arith.addf %24, %114 : vector<32x1xf32>
    %c1_65 = arith.constant 1 : index
    %c0_66 = arith.constant 0 : index
    %c0_67 = arith.constant 0 : index
    %116 = vector.load %arg1[%c1_65, %c0_66, %c0_67] : memref<2x32x128xf32, #tpu.memory_space<vmem>>, vector<1x32x128xf32>
    %117 = vector.shape_cast %116 : vector<1x32x128xf32> to vector<32x128xf32>
    %118 = vector.extract_strided_slice %117 {offsets = [0, 0], sizes = [8, 128], strides = [1, 1]} : vector<32x128xf32> to vector<8x128xf32>
    %c0_i32_68 = arith.constant 0 : i32
    %119 = vector.broadcast %c0_i32_68 : i32 to vector<8x1xi32>
    %120 = arith.addi %5, %119 : vector<8x1xi32>
    %c4_i32_69 = arith.constant 4 : i32
    %121 = vector.broadcast %c4_i32_69 : i32 to vector<8x1xi32>
    %122 = arith.cmpi slt, %120, %121 : vector<8x1xi32>
    %c112_i32_70 = arith.constant 112 : i32
    %123 = tpu.dynamic_rotate %118 by %c112_i32_70 dim 1 : vector<8x128xf32>, i32 -> vector<8x128xf32>
    %cst_71 = arith.constant 0.000000e+00 : f32
    %124 = vector.broadcast %cst_71 : f32 to vector<8x128xf32>
    %125 = arith.select %2, %123, %124 : vector<8x128xi1>, vector<8x128xf32>
    %c16_i32_72 = arith.constant 16 : i32
    %126 = tpu.dynamic_rotate %118 by %c16_i32_72 dim 1 : vector<8x128xf32>, i32 -> vector<8x128xf32>
    %cst_73 = arith.constant 0.000000e+00 : f32
    %127 = vector.broadcast %cst_73 : f32 to vector<8x128xf32>
    %128 = arith.select %4, %126, %127 : vector<8x128xi1>, vector<8x128xf32>
    %129 = vector.shape_cast %122 : vector<8x1xi1> to vector<8x1xi1>
    %130 = vector.broadcast %129 : vector<8x1xi1> to vector<8x128xi1>
    %131 = arith.select %130, %125, %128 : vector<8x128xi1>, vector<8x128xf32>
    %c8_i32_74 = arith.constant 8 : i32
    %132 = vector.broadcast %c8_i32_74 : i32 to vector<8x1xi32>
    %133 = arith.cmpi slt, %120, %132 : vector<8x1xi32>
    %134 = vector.shape_cast %133 : vector<8x1xi1> to vector<8x1xi1>
    %135 = vector.broadcast %134 : vector<8x1xi1> to vector<8x128xi1>
    %136 = arith.select %135, %131, %118 : vector<8x128xi1>, vector<8x128xf32>
    %137 = vector.extract_strided_slice %117 {offsets = [8, 0], sizes = [8, 128], strides = [1, 1]} : vector<32x128xf32> to vector<8x128xf32>
    %138 = arith.addf %137, %136 : vector<8x128xf32>
    %c16_i32_75 = arith.constant 16 : i32
    %139 = tpu.dynamic_rotate %138 by %c16_i32_75 dim 1 : vector<8x128xf32>, i32 -> vector<8x128xf32>
    %cst_76 = arith.constant 0.000000e+00 : f32
    %140 = vector.broadcast %cst_76 : f32 to vector<8x128xf32>
    %141 = arith.select %4, %139, %140 : vector<8x128xi1>, vector<8x128xf32>
    %142 = vector.broadcast %7 : vector<8x1xf32> to vector<8x128xf32>
    %143 = arith.mulf %142, %141 : vector<8x128xf32>
    %144 = vector.broadcast %9 : vector<8x1xf32> to vector<8x128xf32>
    %145 = arith.mulf %144, %138 : vector<8x128xf32>
    %146 = arith.addf %143, %145 : vector<8x128xf32>
    %c112_i32_77 = arith.constant 112 : i32
    %147 = tpu.dynamic_rotate %138 by %c112_i32_77 dim 1 : vector<8x128xf32>, i32 -> vector<8x128xf32>
    %cst_78 = arith.constant 0.000000e+00 : f32
    %148 = vector.broadcast %cst_78 : f32 to vector<8x128xf32>
    %149 = arith.select %2, %147, %148 : vector<8x128xi1>, vector<8x128xf32>
    %150 = vector.broadcast %11 : vector<8x1xf32> to vector<8x128xf32>
    %151 = arith.mulf %150, %149 : vector<8x128xf32>
    %152 = arith.addf %146, %151 : vector<8x128xf32>
    %153 = vector.extract_strided_slice %117 {offsets = [16, 0], sizes = [8, 128], strides = [1, 1]} : vector<32x128xf32> to vector<8x128xf32>
    %154 = arith.addf %153, %152 : vector<8x128xf32>
    %c16_i32_79 = arith.constant 16 : i32
    %155 = tpu.dynamic_rotate %154 by %c16_i32_79 dim 1 : vector<8x128xf32>, i32 -> vector<8x128xf32>
    %cst_80 = arith.constant 0.000000e+00 : f32
    %156 = vector.broadcast %cst_80 : f32 to vector<8x128xf32>
    %157 = arith.select %4, %155, %156 : vector<8x128xi1>, vector<8x128xf32>
    %158 = vector.broadcast %13 : vector<8x1xf32> to vector<8x128xf32>
    %159 = arith.mulf %158, %157 : vector<8x128xf32>
    %160 = vector.broadcast %15 : vector<8x1xf32> to vector<8x128xf32>
    %161 = arith.mulf %160, %154 : vector<8x128xf32>
    %162 = arith.addf %159, %161 : vector<8x128xf32>
    %c112_i32_81 = arith.constant 112 : i32
    %163 = tpu.dynamic_rotate %154 by %c112_i32_81 dim 1 : vector<8x128xf32>, i32 -> vector<8x128xf32>
    %cst_82 = arith.constant 0.000000e+00 : f32
    %164 = vector.broadcast %cst_82 : f32 to vector<8x128xf32>
    %165 = arith.select %2, %163, %164 : vector<8x128xi1>, vector<8x128xf32>
    %166 = vector.broadcast %17 : vector<8x1xf32> to vector<8x128xf32>
    %167 = arith.mulf %166, %165 : vector<8x128xf32>
    %168 = arith.addf %162, %167 : vector<8x128xf32>
    %169 = vector.extract_strided_slice %117 {offsets = [24, 0], sizes = [8, 128], strides = [1, 1]} : vector<32x128xf32> to vector<8x128xf32>
    %170 = arith.addf %169, %168 : vector<8x128xf32>
    %c16_i32_83 = arith.constant 16 : i32
    %171 = tpu.dynamic_rotate %170 by %c16_i32_83 dim 1 : vector<8x128xf32>, i32 -> vector<8x128xf32>
    %cst_84 = arith.constant 0.000000e+00 : f32
    %172 = vector.broadcast %cst_84 : f32 to vector<8x128xf32>
    %173 = arith.select %4, %171, %172 : vector<8x128xi1>, vector<8x128xf32>
    %174 = vector.broadcast %19 : vector<8x1xf32> to vector<8x128xf32>
    %175 = arith.mulf %174, %173 : vector<8x128xf32>
    %176 = vector.broadcast %21 : vector<8x1xf32> to vector<8x128xf32>
    %177 = arith.mulf %176, %170 : vector<8x128xf32>
    %178 = arith.addf %175, %177 : vector<8x128xf32>
    %c112_i32_85 = arith.constant 112 : i32
    %179 = tpu.dynamic_rotate %170 by %c112_i32_85 dim 1 : vector<8x128xf32>, i32 -> vector<8x128xf32>
    %cst_86 = arith.constant 0.000000e+00 : f32
    %180 = vector.broadcast %cst_86 : f32 to vector<8x128xf32>
    %181 = arith.select %2, %179, %180 : vector<8x128xi1>, vector<8x128xf32>
    %182 = vector.broadcast %23 : vector<8x1xf32> to vector<8x128xf32>
    %183 = arith.mulf %182, %181 : vector<8x128xf32>
    %184 = arith.addf %178, %183 : vector<8x128xf32>
    %c1_87 = arith.constant 1 : index
    %c0_88 = arith.constant 0 : index
    %c0_89 = arith.constant 0 : index
    %185 = vector.load %arg6[%c1_87, %c0_88, %c0_89] : memref<2x32x128xf32, #tpu.memory_space<vmem>>, vector<1x8x128xf32>
    %186 = vector.shape_cast %185 : vector<1x8x128xf32> to vector<8x128xf32>
    %187 = vector.shape_cast %136 : vector<8x128xf32> to vector<1x8x128xf32>
    tpu.vector_store %arg6[%c1_87, %c0_88, %c0_89], %187 {strides = array<i32>} : memref<2x32x128xf32, #tpu.memory_space<vmem>>, vector<1x8x128xf32>,
    %cst_90 = arith.constant dense<0.000000e+00> : vector<8xf32>
    %188 = vector.multi_reduction <add>, %136, %cst_90 [1] : vector<8x128xf32> to vector<8xf32>
    %189 = vector.shape_cast %188 : vector<8xf32> to vector<8x1xf32>
    %c1_91 = arith.constant 1 : index
    %c8_92 = arith.constant 8 : index
    %c0_93 = arith.constant 0 : index
    %190 = vector.load %arg6[%c1_91, %c8_92, %c0_93] : memref<2x32x128xf32, #tpu.memory_space<vmem>>, vector<1x8x128xf32>
    %191 = vector.shape_cast %190 : vector<1x8x128xf32> to vector<8x128xf32>
    %192 = vector.shape_cast %152 : vector<8x128xf32> to vector<1x8x128xf32>
    tpu.vector_store %arg6[%c1_91, %c8_92, %c0_93], %192 {strides = array<i32>} : memref<2x32x128xf32, #tpu.memory_space<vmem>>, vector<1x8x128xf32>,
    %cst_94 = arith.constant dense<0.000000e+00> : vector<8xf32>
    %193 = vector.multi_reduction <add>, %152, %cst_94 [1] : vector<8x128xf32> to vector<8xf32>
    %194 = vector.shape_cast %193 : vector<8xf32> to vector<8x1xf32>
    %c1_95 = arith.constant 1 : index
    %c16_96 = arith.constant 16 : index
    %c0_97 = arith.constant 0 : index
    %195 = vector.load %arg6[%c1_95, %c16_96, %c0_97] : memref<2x32x128xf32, #tpu.memory_space<vmem>>, vector<1x8x128xf32>
    %196 = vector.shape_cast %195 : vector<1x8x128xf32> to vector<8x128xf32>
    %197 = vector.shape_cast %168 : vector<8x128xf32> to vector<1x8x128xf32>
    tpu.vector_store %arg6[%c1_95, %c16_96, %c0_97], %197 {strides = array<i32>} : memref<2x32x128xf32, #tpu.memory_space<vmem>>, vector<1x8x128xf32>,
    %cst_98 = arith.constant dense<0.000000e+00> : vector<8xf32>
    %198 = vector.multi_reduction <add>, %168, %cst_98 [1] : vector<8x128xf32> to vector<8xf32>
    %199 = vector.shape_cast %198 : vector<8xf32> to vector<8x1xf32>
    %c1_99 = arith.constant 1 : index
    %c24_100 = arith.constant 24 : index
    %c0_101 = arith.constant 0 : index
    %200 = vector.load %arg6[%c1_99, %c24_100, %c0_101] : memref<2x32x128xf32, #tpu.memory_space<vmem>>, vector<1x8x128xf32>
    %201 = vector.shape_cast %200 : vector<1x8x128xf32> to vector<8x128xf32>
    %202 = vector.shape_cast %184 : vector<8x128xf32> to vector<1x8x128xf32>
    tpu.vector_store %arg6[%c1_99, %c24_100, %c0_101], %202 {strides = array<i32>} : memref<2x32x128xf32, #tpu.memory_space<vmem>>, vector<1x8x128xf32>,
    %cst_102 = arith.constant dense<0.000000e+00> : vector<8xf32>
    %203 = vector.multi_reduction <add>, %184, %cst_102 [1] : vector<8x128xf32> to vector<8xf32>
    %204 = vector.shape_cast %203 : vector<8xf32> to vector<8x1xf32>
    %205 = tpu.concatenate %189, %194, %199, %204 in 0 : vector<8x1xf32>, vector<8x1xf32>, vector<8x1xf32>, vector<8x1xf32> -> vector<32x1xf32>
    %206 = arith.addf %115, %205 : vector<32x1xf32>
    %cst_103 = arith.constant 3.906250e-03 : f32
    %207 = vector.broadcast %cst_103 : f32 to vector<32x1xf32>
    %208 = arith.mulf %206, %207 : vector<32x1xf32>
    %cst_104 = arith.constant 0.000000e+00 : f32
    %209 = vector.broadcast %cst_104 : f32 to vector<32x1xf32>
    %c0_105 = arith.constant 0 : index
    %c0_106 = arith.constant 0 : index
    %c0_107 = arith.constant 0 : index
    %210 = vector.load %arg6[%c0_105, %c0_106, %c0_107] : memref<2x32x128xf32, #tpu.memory_space<vmem>>, vector<1x32x128xf32>
    %211 = vector.shape_cast %210 : vector<1x32x128xf32> to vector<32x128xf32>
    %212 = vector.broadcast %208 : vector<32x1xf32> to vector<32x128xf32>
    %213 = arith.subf %211, %212 : vector<32x128xf32>
    %214 = arith.mulf %213, %213 : vector<32x128xf32>
    %cst_108 = arith.constant dense<0.000000e+00> : vector<32xf32>
    %215 = vector.multi_reduction <add>, %214, %cst_108 [1] : vector<32x128xf32> to vector<32xf32>
    %216 = vector.shape_cast %215 : vector<32xf32> to vector<32x1xf32>
    %217 = arith.addf %209, %216 : vector<32x1xf32>
    %c1_109 = arith.constant 1 : index
    %c0_110 = arith.constant 0 : index
    %c0_111 = arith.constant 0 : index
    %218 = vector.load %arg6[%c1_109, %c0_110, %c0_111] : memref<2x32x128xf32, #tpu.memory_space<vmem>>, vector<1x32x128xf32>
    %219 = vector.shape_cast %218 : vector<1x32x128xf32> to vector<32x128xf32>
    %220 = vector.broadcast %208 : vector<32x1xf32> to vector<32x128xf32>
    %221 = arith.subf %219, %220 : vector<32x128xf32>
    %222 = arith.mulf %221, %221 : vector<32x128xf32>
    %cst_112 = arith.constant dense<0.000000e+00> : vector<32xf32>
    %223 = vector.multi_reduction <add>, %222, %cst_112 [1] : vector<32x128xf32> to vector<32xf32>
    %224 = vector.shape_cast %223 : vector<32xf32> to vector<32x1xf32>
    %225 = arith.addf %217, %224 : vector<32x1xf32>
    %cst_113 = arith.constant 3.906250e-03 : f32
    %226 = vector.broadcast %cst_113 : f32 to vector<32x1xf32>
    %227 = arith.mulf %225, %226 : vector<32x1xf32>
    %c0_114 = arith.constant 0 : index
    %c0_115 = arith.constant 0 : index
    %228 = vector.load %arg3[%c0_114, %c0_115] : memref<32x1xf32, #tpu.memory_space<vmem>>, vector<32x1xf32>
    %cst_116 = arith.constant 9.99999974E-6 : f32
    %229 = vector.broadcast %cst_116 : f32 to vector<32x1xf32>
    %230 = arith.addf %227, %229 : vector<32x1xf32>
    %231 = math.rsqrt %230 : vector<32x1xf32>
    %232 = arith.mulf %228, %231 : vector<32x1xf32>
    %c0_117 = arith.constant 0 : index
    %c0_118 = arith.constant 0 : index
    %233 = vector.load %arg4[%c0_117, %c0_118] : memref<32x1xf32, #tpu.memory_space<vmem>>, vector<32x1xf32>
    %234 = arith.mulf %208, %232 : vector<32x1xf32>
    %235 = arith.subf %233, %234 : vector<32x1xf32>
    %c0_119 = arith.constant 0 : index
    %c0_120 = arith.constant 0 : index
    %c0_121 = arith.constant 0 : index
    %236 = vector.load %arg6[%c0_119, %c0_120, %c0_121] : memref<2x32x128xf32, #tpu.memory_space<vmem>>, vector<1x32x128xf32>
    %237 = vector.shape_cast %236 : vector<1x32x128xf32> to vector<32x128xf32>
    %238 = vector.broadcast %232 : vector<32x1xf32> to vector<32x128xf32>
    %239 = arith.mulf %237, %238 : vector<32x128xf32>
    %240 = vector.broadcast %235 : vector<32x1xf32> to vector<32x128xf32>
    %241 = arith.addf %239, %240 : vector<32x128xf32>
    %cst_122 = arith.constant 0.000000e+00 : f32
    %242 = vector.broadcast %cst_122 : f32 to vector<32x128xf32>
    %243 = arith.maximumf %241, %242 : vector<32x128xf32>
    %c0_123 = arith.constant 0 : index
    %c0_124 = arith.constant 0 : index
    %c0_125 = arith.constant 0 : index
    %244 = vector.load %arg5[%c0_123, %c0_124, %c0_125] : memref<2x32x128xf32, #tpu.memory_space<vmem>>, vector<1x32x128xf32>
    %245 = vector.shape_cast %244 : vector<1x32x128xf32> to vector<32x128xf32>
    %246 = vector.shape_cast %243 : vector<32x128xf32> to vector<1x32x128xf32>
    tpu.vector_store %arg5[%c0_123, %c0_124, %c0_125], %246 {strides = array<i32>} : memref<2x32x128xf32, #tpu.memory_space<vmem>>, vector<1x32x128xf32>,
    %c1_126 = arith.constant 1 : index
    %c0_127 = arith.constant 0 : index
    %c0_128 = arith.constant 0 : index
    %247 = vector.load %arg6[%c1_126, %c0_127, %c0_128] : memref<2x32x128xf32, #tpu.memory_space<vmem>>, vector<1x32x128xf32>
    %248 = vector.shape_cast %247 : vector<1x32x128xf32> to vector<32x128xf32>
    %249 = vector.broadcast %232 : vector<32x1xf32> to vector<32x128xf32>
    %250 = arith.mulf %248, %249 : vector<32x128xf32>
    %251 = vector.broadcast %235 : vector<32x1xf32> to vector<32x128xf32>
    %252 = arith.addf %250, %251 : vector<32x128xf32>
    %cst_129 = arith.constant 0.000000e+00 : f32
    %253 = vector.broadcast %cst_129 : f32 to vector<32x128xf32>
    %254 = arith.maximumf %252, %253 : vector<32x128xf32>
    %c1_130 = arith.constant 1 : index
    %c0_131 = arith.constant 0 : index
    %c0_132 = arith.constant 0 : index
    %255 = vector.load %arg5[%c1_130, %c0_131, %c0_132] : memref<2x32x128xf32, #tpu.memory_space<vmem>>, vector<1x32x128xf32>
    %256 = vector.shape_cast %255 : vector<1x32x128xf32> to vector<32x128xf32>
    %257 = vector.shape_cast %254 : vector<32x128xf32> to vector<1x32x128xf32>
    tpu.vector_store %arg5[%c1_130, %c0_131, %c0_132], %257 {strides = array<i32>} : memref<2x32x128xf32, #tpu.memory_space<vmem>>, vector<1x32x128xf32>,
    return
  }
  func.func @transform_0(%arg0: i32) -> (i32, i32, i32) {
    %c0_i32 = arith.constant 0 : i32
    %c0_i32_0 = arith.constant 0 : i32
    %c0_i32_1 = arith.constant 0 : i32
    %c0_i32_2 = arith.constant 0 : i32
    return %c0_i32, %c0_i32_0, %c0_i32_1 : i32, i32, i32
  }
  func.func @transform_1(%arg0: i32) -> (i32, i32, i32, i32) {
    %c0_i32 = arith.constant 0 : i32
    %c0_i32_0 = arith.constant 0 : i32
    %c0_i32_1 = arith.constant 0 : i32
    %c0_i32_2 = arith.constant 0 : i32
    %c0_i32_3 = arith.constant 0 : i32
    return %c0_i32, %c0_i32_0, %c0_i32_1, %c0_i32_2 : i32, i32, i32, i32
  }
  func.func @transform_2(%arg0: i32) -> (i32, i32) {
    %c0_i32 = arith.constant 0 : i32
    %c0_i32_0 = arith.constant 0 : i32
    %c0_i32_1 = arith.constant 0 : i32
    return %c0_i32, %c0_i32_0 : i32, i32
  }
  func.func @transform_3(%arg0: i32) -> (i32, i32) {
    %c0_i32 = arith.constant 0 : i32
    %c0_i32_0 = arith.constant 0 : i32
    %c0_i32_1 = arith.constant 0 : i32
    return %c0_i32, %c0_i32_0 : i32, i32
  }
  func.func @transform_4(%arg0: i32) -> (i32, i32, i32) {
    %c0_i32 = arith.constant 0 : i32
    %c0_i32_0 = arith.constant 0 : i32
    %c0_i32_1 = arith.constant 0 : i32
    %c0_i32_2 = arith.constant 0 : i32
    return %c0_i32, %c0_i32_0, %c0_i32_1 : i32, i32, i32
  }
}

</mosaic_0001>

<llo_original>
// kernel: tpu_custom_call.1
$region0: #{tpu_custom_call.1}
  #allocation0 [shape = 'u32[]', space=smem, size = 0x4, offset = 0x4, fixed_abs, tag = 'smem constant byte address 0x4 - core index']
  #allocation1 [shape = 'u32[144,128]{1,0:T(1,128)}', space=vmem, size = 0x12000, scoped, tag = 'internal scratch']
  #allocation2 [shape = 'f32[2,32,128]{2,1,0:T(8,128)}', space=vmem, size = 0x8000, scoped, tag = 'scratch operand']
  %s0 = inlined_call_operand.vmem [shape: f32[2,32,128], index: 0, kind: input, shape index: {}]
  %s1 = inlined_call_operand.vmem [shape: f32[3,3,8,1], index: 1, kind: input, shape index: {}]
  %s2 = inlined_call_operand.vmem [shape: f32[32,1], index: 2, kind: input, shape index: {}]
  %s3 = inlined_call_operand.vmem [shape: f32[32,1], index: 3, kind: input, shape index: {}]
  %s4 = inlined_call_operand.hbm [shape: f32[2,32,128], index: 4, kind: output, shape index: {}]
  %s5 = sld [smem:[#allocation0]]
  $region26: #{tpu_custom_call.1} parent=0
    _
  %s7 = ssub.s32 1, %s5
  %s8 = scalar_select 0, %s7, %s5
  $region1: #{tpu_custom_call.1} parent=0
    #allocation3 [shape = 'u8[32768]{0}', space=vmem, size = 0x8000, scoped, tag = 'output window, operand 0, single buffered']
    #allocation4 [shape = 's32[1]{0}', space=sflag, size = 0x4, scoped, tag = 'scoped memory for tpu_custom_call.1']
    %9 = vsyncpa [#allocation4], 0
    // Predicated region
    $region2: #{tpu_custom_call.1} parent=1 // pred_check
      _
    $region3: #{tpu_custom_call.1} parent=1 // pred_check_branch
      %11 = sbr.rel (0) target = $region5
    $region4: #{tpu_custom_call.1} parent=1 // pred_region
      _
    $region5: #{tpu_custom_call.1} parent=1 // pred_fallthru
      _
    // Predicated region
    $region6: #{tpu_custom_call.1} parent=1 // pred_check
      _
    $region7: #{tpu_custom_call.1} parent=1 // pred_check_branch
      %13 = sbr.rel (0) target = $region9
    $region8: #{tpu_custom_call.1} parent=1 // pred_region
      _
    $region9: #{tpu_custom_call.1} parent=1 // pred_fallthru
      _
    // Predicated region
    $region10: #{tpu_custom_call.1} parent=1 // pred_check
      _
    $region11: #{tpu_custom_call.1} parent=1 // pred_check_branch
      %15 = sbr.rel (0) target = $region13
    $region12: #{tpu_custom_call.1} parent=1 // pred_region
      _
    $region13: #{tpu_custom_call.1} parent=1 // pred_fallthru
      _
    // Predicated region
    $region14: #{tpu_custom_call.1} parent=1 // pred_check
      _
    $region15: #{tpu_custom_call.1} parent=1 // pred_check_branch
      %17 = sbr.rel (0) target = $region17
    $region16: #{tpu_custom_call.1} parent=1 // pred_region
      _
    $region17: #{tpu_custom_call.1} parent=1 // pred_fallthru
      _
    %v18 = vlaneseq
    %v19 = vand.u32 %v18, 127
    %vm20 = vcmp.lt.s32.totalorder %v19, 112
    %vm21 = vcmp.ge.s32.totalorder %v19, 16
    %v22 = vlaneseq
    %v23 = vshrl.u32 %v22, 7
    %v24 = vld [vmem:[%s1] sm:$0xff]
    %s25 = scalar_lea.vmem %s1, 8
    %v26 = vld [vmem:[%s25] sm:$0xff]
    %s27 = scalar_lea.vmem %s1, 16
    %v28 = vld [vmem:[%s27] sm:$0xff]
    %s29 = scalar_lea.vmem %s1, 24
    %v30 = vld [vmem:[%s29] sm:$0xff]
    %s31 = scalar_lea.vmem %s1, 32
    %v32 = vld [vmem:[%s31] sm:$0xff]
    %s33 = scalar_lea.vmem %s1, 40
    %v34 = vld [vmem:[%s33] sm:$0xff]
    %s35 = scalar_lea.vmem %s1, 48
    %v36 = vld [vmem:[%s35] sm:$0xff]
    %s37 = scalar_lea.vmem %s1, 56
    %v38 = vld [vmem:[%s37] sm:$0xff]
    %s39 = scalar_lea.vmem %s1, 64
    %v40 = vld [vmem:[%s39] sm:$0xff]
    %v41 = vld [vmem:[%s0] sm:$0xff]
    %v42 = vld [vmem:[%s0 + $0x8] sm:$0xff]
    %v43 = vld [vmem:[%s0 + $0x10] sm:$0xff]
    %v44 = vld [vmem:[%s0 + $0x18] sm:$0xff]
    %vm45 = vcmp.lt.s32.totalorder %v23, 4
    %46 = vrot.lane.b32.xlu0 %v41, 112
    %v47 = vpop.permute.xlu0 %46
    %v48 = vsel %vm20, %v47, 0.0
    %49 = vrot.lane.b32.xlu0 %v41, 16
    %v50 = vpop.permute.xlu0 %49
    %v51 = vsel %vm21, %v50, 0.0
    %v52 = vsel %vm45, 1, 0
    %vm53 = vcmp.eq.s32.totalorder %v52, 1
    %v54 = vsel %vm53, %v48, %v51
    %vm55 = vcmp.lt.s32.totalorder %v23, 8
    %v56 = vsel %vm55, 1, 0
    %vm57 = vcmp.eq.s32.totalorder %v56, 1
    %v58 = vsel %vm57, %v54, %v41
    %v59 = vadd.f32 %v42, %v58
    %60 = vrot.lane.b32.xlu0 %v59, 16
    %v61 = vpop.permute.xlu0 %60
    %v62 = vsel %vm21, %v61, 0.0
    %64 = vset.pattern.permute.xlu0 0
    %65 = vperm.xlu0 %64, %v24
    %v66 = vpop.permute.xlu0 %65
    %v68 = vmul.f32 %v66, %v62
    %70 = vset.pattern.permute.xlu0 0
    %71 = vperm.xlu0 %70, %v26
    %v72 = vpop.permute.xlu0 %71
    %v74 = vmul.f32 %v72, %v59
    %v75 = vadd.f32 %v68, %v74
    %76 = vrot.lane.b32.xlu0 %v59, 112
    %v77 = vpop.permute.xlu0 %76
    %v78 = vsel %vm20, %v77, 0.0
    %80 = vset.pattern.permute.xlu0 0
    %81 = vperm.xlu0 %80, %v28
    %v82 = vpop.permute.xlu0 %81
    %v84 = vmul.f32 %v82, %v78
    %v85 = vadd.f32 %v75, %v84
    %v86 = vadd.f32 %v43, %v85
    %87 = vrot.lane.b32.xlu0 %v86, 16
    %v88 = vpop.permute.xlu0 %87
    %v89 = vsel %vm21, %v88, 0.0
    %91 = vset.pattern.permute.xlu0 0
    %92 = vperm.xlu0 %91, %v30
    %v93 = vpop.permute.xlu0 %92
    %v95 = vmul.f32 %v93, %v89
    %97 = vset.pattern.permute.xlu0 0
    %98 = vperm.xlu0 %97, %v32
    %v99 = vpop.permute.xlu0 %98
    %v101 = vmul.f32 %v99, %v86
    %v102 = vadd.f32 %v95, %v101
    %103 = vrot.lane.b32.xlu0 %v86, 112
    %v104 = vpop.permute.xlu0 %103
    %v105 = vsel %vm20, %v104, 0.0
    %107 = vset.pattern.permute.xlu0 0
    %108 = vperm.xlu0 %107, %v34
    %v109 = vpop.permute.xlu0 %108
    %v111 = vmul.f32 %v109, %v105
    %v112 = vadd.f32 %v102, %v111
    %v113 = vadd.f32 %v44, %v112
    %114 = vrot.lane.b32.xlu0 %v113, 16
    %v115 = vpop.permute.xlu0 %114
    %v116 = vsel %vm21, %v115, 0.0
    %118 = vset.pattern.permute.xlu0 0
    %119 = vperm.xlu0 %118, %v36
    %v120 = vpop.permute.xlu0 %119
    %v122 = vmul.f32 %v120, %v116
    %124 = vset.pattern.permute.xlu0 0
    %125 = vperm.xlu0 %124, %v38
    %v126 = vpop.permute.xlu0 %125
    %v128 = vmul.f32 %v126, %v113
    %v129 = vadd.f32 %v122, %v128
    %130 = vrot.lane.b32.xlu0 %v113, 112
    %v131 = vpop.permute.xlu0 %130
    %v132 = vsel %vm20, %v131, 0.0
    %134 = vset.pattern.permute.xlu0 0
    %135 = vperm.xlu0 %134, %v40
    %v136 = vpop.permute.xlu0 %135
    %v138 = vmul.f32 %v136, %v132
    %v139 = vadd.f32 %v129, %v138
    %140 = vst [vmem:[#allocation2] sm:$0xff] %v58
    %141 = vadd.xlane.f32.xlu0 %v58
    %v142 = vpop.xlane.xlu0 %141
    %143 = vst [vmem:[#allocation2 + $0x8] sm:$0xff] %v85
    %144 = vadd.xlane.f32.xlu0 %v85
    %v145 = vpop.xlane.xlu0 %144
    %146 = vst [vmem:[#allocation2 + $0x10] sm:$0xff] %v112
    %147 = vadd.xlane.f32.xlu0 %v112
    %v148 = vpop.xlane.xlu0 %147
    %149 = vst [vmem:[#allocation2 + $0x18] sm:$0xff] %v139
    %150 = vadd.xlane.f32.xlu0 %v139
    %v151 = vpop.xlane.xlu0 %150
    %v152 = vadd.f32 %v142, 0.0
    %v153 = vadd.f32 %v145, 0.0
    %v154 = vadd.f32 %v148, 0.0
    %v155 = vadd.f32 %v151, 0.0
    %s156 = scalar_lea.vmem %s0, 32
    %v157 = vld [vmem:[%s156] sm:$0xff]
    %v158 = vld [vmem:[%s156 + $0x8] sm:$0xff]
    %v159 = vld [vmem:[%s156 + $0x10] sm:$0xff]
    %v160 = vld [vmem:[%s156 + $0x18] sm:$0xff]
    %161 = vrot.lane.b32.xlu0 %v157, 112
    %v162 = vpop.permute.xlu0 %161
    %v163 = vsel %vm20, %v162, 0.0
    %164 = vrot.lane.b32.xlu0 %v157, 16
    %v165 = vpop.permute.xlu0 %164
    %v166 = vsel %vm21, %v165, 0.0
    %v167 = vsel %vm53, %v163, %v166
    %v168 = vsel %vm57, %v167, %v157
    %v169 = vadd.f32 %v158, %v168
    %170 = vrot.lane.b32.xlu0 %v169, 16
    %v171 = vpop.permute.xlu0 %170
    %v172 = vsel %vm21, %v171, 0.0
    %v173 = vmul.f32 %v66, %v172
    %v174 = vmul.f32 %v72, %v169
    %v175 = vadd.f32 %v173, %v174
    %176 = vrot.lane.b32.xlu0 %v169, 112
    %v177 = vpop.permute.xlu0 %176
    %v178 = vsel %vm20, %v177, 0.0
    %v179 = vmul.f32 %v82, %v178
    %v180 = vadd.f32 %v175, %v179
    %v181 = vadd.f32 %v159, %v180
    %182 = vrot.lane.b32.xlu0 %v181, 16
    %v183 = vpop.permute.xlu0 %182
    %v184 = vsel %vm21, %v183, 0.0
    %v185 = vmul.f32 %v93, %v184
    %v186 = vmul.f32 %v99, %v181
    %v187 = vadd.f32 %v185, %v186
    %188 = vrot.lane.b32.xlu0 %v181, 112
    %v189 = vpop.permute.xlu0 %188
    %v190 = vsel %vm20, %v189, 0.0
    %v191 = vmul.f32 %v109, %v190
    %v192 = vadd.f32 %v187, %v191
    %v193 = vadd.f32 %v160, %v192
    %194 = vrot.lane.b32.xlu0 %v193, 16
    %v195 = vpop.permute.xlu0 %194
    %v196 = vsel %vm21, %v195, 0.0
    %v197 = vmul.f32 %v120, %v196
    %v198 = vmul.f32 %v126, %v193
    %v199 = vadd.f32 %v197, %v198
    %200 = vrot.lane.b32.xlu0 %v193, 112
    %v201 = vpop.permute.xlu0 %200
    %v202 = vsel %vm20, %v201, 0.0
    %v203 = vmul.f32 %v136, %v202
    %v204 = vadd.f32 %v199, %v203
    %s205 = scalar_lea.vmem [#allocation2], 32
    %206 = vst [vmem:[%s205] sm:$0xff] %v168
    %207 = vadd.xlane.f32.xlu0 %v168
    %v208 = vpop.xlane.xlu0 %207
    %209 = vst [vmem:[%s205 + $0x8] sm:$0xff] %v180
    %210 = vadd.xlane.f32.xlu0 %v180
    %v211 = vpop.xlane.xlu0 %210
    %212 = vst [vmem:[%s205 + $0x10] sm:$0xff] %v192
    %213 = vadd.xlane.f32.xlu0 %v192
    %v214 = vpop.xlane.xlu0 %213
    %215 = vst [vmem:[%s205 + $0x18] sm:$0xff] %v204
    %216 = vadd.xlane.f32.xlu0 %v204
    %v217 = vpop.xlane.xlu0 %216
    %v218 = vadd.f32 %v152, %v208
    %v219 = vadd.f32 %v153, %v211
    %v220 = vadd.f32 %v154, %v214
    %v221 = vadd.f32 %v155, %v217
    %v222 = vmul.f32 %v218, 0.00390625
    %v223 = vmul.f32 %v219, 0.00390625
    %v224 = vmul.f32 %v220, 0.00390625
    %v225 = vmul.f32 %v221, 0.00390625
    %v226 = vld [vmem:[#allocation2] sm:$0xff]
    %v227 = vld [vmem:[#allocation2 + $0x8] sm:$0xff]
    %v228 = vld [vmem:[#allocation2 + $0x10] sm:$0xff]
    %v229 = vld [vmem:[#allocation2 + $0x18] sm:$0xff]
    %231 = vset.pattern.permute.xlu0 0
    %232 = vperm.xlu0 %231, %v222
    %v233 = vpop.permute.xlu0 %232
    %236 = vset.pattern.permute.xlu0 0
    %237 = vperm.xlu0 %236, %v223
    %v238 = vpop.permute.xlu0 %237
    %241 = vset.pattern.permute.xlu0 0
    %242 = vperm.xlu0 %241, %v224
    %v243 = vpop.permute.xlu0 %242
    %246 = vset.pattern.permute.xlu0 0
    %247 = vperm.xlu0 %246, %v225
    %v248 = vpop.permute.xlu0 %247
    %v250 = vsub.f32 %v226, %v233
    %v251 = vsub.f32 %v227, %v238
    %v252 = vsub.f32 %v228, %v243
    %v253 = vsub.f32 %v229, %v248
    %v254 = vmul.f32 %v250, %v250
    %v255 = vmul.f32 %v251, %v251
    %v256 = vmul.f32 %v252, %v252
    %v257 = vmul.f32 %v253, %v253
    %258 = vadd.xlane.f32.xlu0 %v254
    %v259 = vpop.xlane.xlu0 %258
    %260 = vadd.xlane.f32.xlu0 %v255
    %v261 = vpop.xlane.xlu0 %260
    %262 = vadd.xlane.f32.xlu0 %v256
    %v263 = vpop.xlane.xlu0 %262
    %264 = vadd.xlane.f32.xlu0 %v257
    %v265 = vpop.xlane.xlu0 %264
    %v266 = vadd.f32 %v259, 0.0
    %v267 = vadd.f32 %v261, 0.0
    %v268 = vadd.f32 %v263, 0.0
    %v269 = vadd.f32 %v265, 0.0
    %v270 = vld [vmem:[%s205] sm:$0xff]
    %v271 = vld [vmem:[%s205 + $0x8] sm:$0xff]
    %v272 = vld [vmem:[%s205 + $0x10] sm:$0xff]
    %v273 = vld [vmem:[%s205 + $0x18] sm:$0xff]
    %v274 = vsub.f32 %v270, %v233
    %v275 = vsub.f32 %v271, %v238
    %v276 = vsub.f32 %v272, %v243
    %v277 = vsub.f32 %v273, %v248
    %v278 = vmul.f32 %v274, %v274
    %v279 = vmul.f32 %v275, %v275
    %v280 = vmul.f32 %v276, %v276
    %v281 = vmul.f32 %v277, %v277
    %282 = vadd.xlane.f32.xlu0 %v278
    %v283 = vpop.xlane.xlu0 %282
    %284 = vadd.xlane.f32.xlu0 %v279
    %v285 = vpop.xlane.xlu0 %284
    %286 = vadd.xlane.f32.xlu0 %v280
    %v287 = vpop.xlane.xlu0 %286
    %288 = vadd.xlane.f32.xlu0 %v281
    %v289 = vpop.xlane.xlu0 %288
    %v290 = vadd.f32 %v266, %v283
    %v291 = vadd.f32 %v267, %v285
    %v292 = vadd.f32 %v268, %v287
    %v293 = vadd.f32 %v269, %v289
    %v294 = vmul.f32 %v290, 0.00390625
    %v295 = vmul.f32 %v291, 0.00390625
    %v296 = vmul.f32 %v292, 0.00390625
    %v297 = vmul.f32 %v293, 0.00390625
    %v298 = vld [vmem:[%s2] sm:$0xff]
    %v299 = vld [vmem:[%s2 + $0x8] sm:$0xff]
    %v300 = vld [vmem:[%s2 + $0x10] sm:$0xff]
    %v301 = vld [vmem:[%s2 + $0x18] sm:$0xff]
    %v302 = vadd.f32 %v294, 1e-05
    %v303 = vadd.f32 %v295, 1e-05
    %v304 = vadd.f32 %v296, 1e-05
    %v305 = vadd.f32 %v297, 1e-05
    %v306 = vrsqrt.pop %v302
    %v307 = vrsqrt.pop %v303
    %v308 = vrsqrt.pop %v304
    %v309 = vrsqrt.pop %v305
    %v310 = vmul.f32 %v298, %v306
    %v311 = vmul.f32 %v299, %v307
    %v312 = vmul.f32 %v300, %v308
    %v313 = vmul.f32 %v301, %v309
    %v314 = vld [vmem:[%s3] sm:$0xff]
    %v315 = vld [vmem:[%s3 + $0x8] sm:$0xff]
    %v316 = vld [vmem:[%s3 + $0x10] sm:$0xff]
    %v317 = vld [vmem:[%s3 + $0x18] sm:$0xff]
    %v318 = vmul.f32 %v222, %v310
    %v319 = vmul.f32 %v223, %v311
    %v320 = vmul.f32 %v224, %v312
    %v321 = vmul.f32 %v225, %v313
    %v322 = vsub.f32 %v314, %v318
    %v323 = vsub.f32 %v315, %v319
    %v324 = vsub.f32 %v316, %v320
    %v325 = vsub.f32 %v317, %v321
    %327 = vset.pattern.permute.xlu0 0
    %328 = vperm.xlu0 %327, %v310
    %v329 = vpop.permute.xlu0 %328
    %332 = vset.pattern.permute.xlu0 0
    %333 = vperm.xlu0 %332, %v311
    %v334 = vpop.permute.xlu0 %333
    %337 = vset.pattern.permute.xlu0 0
    %338 = vperm.xlu0 %337, %v312
    %v339 = vpop.permute.xlu0 %338
    %342 = vset.pattern.permute.xlu0 0
    %343 = vperm.xlu0 %342, %v313
    %v344 = vpop.permute.xlu0 %343
    %v346 = vmul.f32 %v226, %v329
    %v347 = vmul.f32 %v227, %v334
    %v348 = vmul.f32 %v228, %v339
    %v349 = vmul.f32 %v229, %v344
    %351 = vset.pattern.permute.xlu0 0
    %352 = vperm.xlu0 %351, %v322
    %v353 = vpop.permute.xlu0 %352
    %356 = vset.pattern.permute.xlu0 0
    %357 = vperm.xlu0 %356, %v323
    %v358 = vpop.permute.xlu0 %357
    %361 = vset.pattern.permute.xlu0 0
    %362 = vperm.xlu0 %361, %v324
    %v363 = vpop.permute.xlu0 %362
    %366 = vset.pattern.permute.xlu0 0
    %367 = vperm.xlu0 %366, %v325
    %v368 = vpop.permute.xlu0 %367
    %v370 = vadd.f32 %v346, %v353
    %v371 = vadd.f32 %v347, %v358
    %v372 = vadd.f32 %v348, %v363
    %v373 = vadd.f32 %v349, %v368
    %v374 = vmax.f32 %v370, 0.0
    %v375 = vmax.f32 %v371, 0.0
    %v376 = vmax.f32 %v372, 0.0
    %v377 = vmax.f32 %v373, 0.0
    %378 = vst [vmem:[#allocation3] sm:$0xff] %v374
    %379 = vst [vmem:[#allocation3 + $0x8] sm:$0xff] %v375
    %380 = vst [vmem:[#allocation3 + $0x10] sm:$0xff] %v376
    %381 = vst [vmem:[#allocation3 + $0x18] sm:$0xff] %v377
    %v382 = vld [vmem:[%s205] sm:$0xff]
    %v383 = vld [vmem:[%s205 + $0x8] sm:$0xff]
    %v384 = vld [vmem:[%s205 + $0x10] sm:$0xff]
    %v385 = vld [vmem:[%s205 + $0x18] sm:$0xff]
    %v386 = vmul.f32 %v382, %v329
    %v387 = vmul.f32 %v383, %v334
    %v388 = vmul.f32 %v384, %v339
    %v389 = vmul.f32 %v385, %v344
    %v390 = vadd.f32 %v386, %v353
    %v391 = vadd.f32 %v387, %v358
    %v392 = vadd.f32 %v388, %v363
    %v393 = vadd.f32 %v389, %v368
    %v394 = vmax.f32 %v390, 0.0
    %v395 = vmax.f32 %v391, 0.0
    %v396 = vmax.f32 %v392, 0.0
    %v397 = vmax.f32 %v393, 0.0
    %s398 = scalar_lea.vmem [#allocation3], 32
    %399 = vst [vmem:[%s398] sm:$0xff] %v394
    %400 = vst [vmem:[%s398 + $0x8] sm:$0xff] %v395
    %401 = vst [vmem:[%s398 + $0x10] sm:$0xff] %v396
    %402 = vst [vmem:[%s398 + $0x18] sm:$0xff] %v397
    // Predicated region
    $region18: #{tpu_custom_call.1} parent=1 // pred_check
      _
    $region19: #{tpu_custom_call.1} parent=1 // pred_check_branch
      %404 = sbr.rel (0) target = $region21
    $region20: #{tpu_custom_call.1} parent=1 // pred_region
      %s406 = ssub.s32 1024, 1024
      %407 = vsyncadd [#allocation4], %s406
      %s408 = sshll.u32 [#allocation3], 4
      %s409 = int_to_ptr.vmem [resolvable:$true] %s408
      %414 = dma.vmem_to_hbm [thread:$0]  %s409, 1024, %s4, [#allocation4], 128, 128, 8
    $region21: #{tpu_custom_call.1} parent=1 // pred_fallthru
      _
    // Predicated region
    $region22: #{tpu_custom_call.1} parent=1 // pred_check
      _
    $region23: #{tpu_custom_call.1} parent=1 // pred_check_branch
      %416 = sbr.rel (0) target = $region25
    $region24: #{tpu_custom_call.1} parent=1 // pred_region
      %417 = dma.done [#allocation4], 1024
    $region25: #{tpu_custom_call.1} parent=1 // pred_fallthru
      _
    %418 = vsyncpa [#allocation4], 1

</llo_original>
